<compile_context>
chip_gen: v7x
topology: tpu7x:2x2x1
jax: 0.10.0
libtpu: 0.0.40
codegen_flags: <defaults>
</compile_context>

<pallas_src>
import jax
import jax.numpy as jnp
from jax.experimental import pallas as pl
from jax.experimental.pallas import tpu as pltpu

LANE = 128
_STEP_BYTES = 2 << 20    # ~2 MiB of input per grid step (summed over streams)
_SPLIT_BYTES = 1 << 20   # force >=2 grid steps above this (v7x megacore split)


def _round_up(x, m):
    return ((x + m - 1) // m) * m


def _sublane_multiple(dtype):
    # f32 -> 8, bf16/f16 -> 16, int8/fp8 -> 32 (sub-32-bit packs along sublanes).
    itemsize = jnp.dtype(dtype).itemsize
    return max(8, 8 * (4 // max(1, itemsize)))


def _to_slab(x):
    """Flatten to a lane-dense (rows, 128) slab; pad tail to a lane multiple only."""
    flat = x.reshape(-1)
    n = flat.shape[0]
    pad = (-n) % LANE
    if pad:
        flat = jnp.pad(flat, (0, pad))
    return flat.reshape(-1, LANE), n


def _from_slab(slab, n, shape):
    return slab.reshape(-1)[:n].reshape(shape)


def _pick_tile(m, grid_n, sub):
    """Row-tile: multiple of the sublane packing, or the full extent if smaller."""
    tm = _round_up(pl.cdiv(m, grid_n), sub)
    if tm >= m:
        return m                     # single full-extent block (always legal)
    return tm


# --------------------------------------------------------------------------
# Kernels
# --------------------------------------------------------------------------

def _relu_kernel(x_ref, o_ref):
    o_ref[...] = jnp.maximum(x_ref[...], jnp.zeros((), x_ref.dtype))


def _fused_relu_kernel(xh_ref, xl_ref, oh_ref, ol_ref):
    oh_ref[...] = jnp.maximum(xh_ref[...], jnp.zeros((), xh_ref.dtype))
    ol_ref[...] = jnp.maximum(xl_ref[...], jnp.zeros((), xl_ref.dtype))


# --------------------------------------------------------------------------
# pallas_call wrappers on (rows, 128) slabs
# --------------------------------------------------------------------------

def _relu_slab(x2):
    m, _ = x2.shape
    itemsize = jnp.dtype(x2.dtype).itemsize
    sub = _sublane_multiple(x2.dtype)
    nbytes = m * LANE * itemsize

    grid_n = max(1, pl.cdiv(nbytes, _STEP_BYTES))
    if grid_n == 1 and nbytes >= _SPLIT_BYTES:
        grid_n = 2                               # let both v7x TensorCores work
    tm = _pick_tile(m, grid_n, sub)
    grid_n = pl.cdiv(m, tm)

    cost = pl.CostEstimate(flops=m * LANE, transcendentals=0,
                           bytes_accessed=2 * nbytes)
    return pl.pallas_call(
        _relu_kernel,
        out_shape=jax.ShapeDtypeStruct((m, LANE), x2.dtype),
        grid_spec=pltpu.PrefetchScalarGridSpec(
            num_scalar_prefetch=0,
            grid=(grid_n,),
            in_specs=[pl.BlockSpec((tm, LANE), lambda i: (i, 0))],
            out_specs=pl.BlockSpec((tm, LANE), lambda i: (i, 0)),
        ),
        compiler_params=pltpu.CompilerParams(
            dimension_semantics=("parallel",)),
        cost_estimate=cost,
    )(x2)


def _oct_relu_slabs(xh2, xl2):
    """Single fused pallas_call applying ReLU to both octave slabs."""
    mh, ml = xh2.shape[0], xl2.shape[0]
    isz_h = jnp.dtype(xh2.dtype).itemsize
    isz_l = jnp.dtype(xl2.dtype).itemsize
    sub_h = _sublane_multiple(xh2.dtype)
    sub_l = _sublane_multiple(xl2.dtype)
    total_bytes = (mh * isz_h + ml * isz_l) * LANE

    grid_n = max(1, pl.cdiv(total_bytes, _STEP_BYTES))
    if grid_n == 1 and total_bytes >= _SPLIT_BYTES:
        grid_n = 2                               # v7x megacore split

    tm_h = _pick_tile(mh, grid_n, sub_h)
    tm_l = _pick_tile(ml, grid_n, sub_l)
    nh = pl.cdiv(mh, tm_h)
    nl = pl.cdiv(ml, tm_l)
    grid_n = max(nh, nl)

    # The shorter stream clamps to its last block once exhausted; the kernel
    # just rewrites that block with identical data, which is harmless. Only
    # mark the axis "parallel" when both index maps are injective so megacore
    # sharding is unambiguously safe; otherwise fall back to "arbitrary"
    # (only happens for tiny tensors where megacore does not matter).
    h_spec = pl.BlockSpec((tm_h, LANE), lambda i: (jnp.minimum(i, nh - 1), 0))
    l_spec = pl.BlockSpec((tm_l, LANE), lambda i: (jnp.minimum(i, nl - 1), 0))
    sem = ("parallel",) if (nh == grid_n and nl == grid_n) else ("arbitrary",)

    cost = pl.CostEstimate(flops=(mh + ml) * LANE, transcendentals=0,
                           bytes_accessed=2 * total_bytes)
    return pl.pallas_call(
        _fused_relu_kernel,
        out_shape=(jax.ShapeDtypeStruct((mh, LANE), xh2.dtype),
                   jax.ShapeDtypeStruct((ml, LANE), xl2.dtype)),
        grid_spec=pltpu.PrefetchScalarGridSpec(
            num_scalar_prefetch=0,
            grid=(grid_n,),
            in_specs=[h_spec, l_spec],
            out_specs=[h_spec, l_spec],
        ),
        compiler_params=pltpu.CompilerParams(dimension_semantics=sem),
        cost_estimate=cost,
    )(xh2, xl2)


# --------------------------------------------------------------------------
# jitted entry points
# --------------------------------------------------------------------------

@jax.jit
def _oct_relu_single(x):
    slab, n = _to_slab(x)
    return _from_slab(_relu_slab(slab), n, x.shape)


@jax.jit
def _oct_relu_pair(xh, xl):
    xh2, n_h = _to_slab(xh)
    xl2, n_l = _to_slab(xl)
    yh2, yl2 = _oct_relu_slabs(xh2, xl2)
    return _from_slab(yh2, n_h, xh.shape), _from_slab(yl2, n_l, xl.shape)


class ReLUOctConv2d:
    """JAX/Pallas port of the PyTorch ReLU_OctConv2d module."""

    def __init__(self, channels, alpha=0.5):
        assert 0 <= alpha <= 1, "Alpha must be in iterval [0, 1]"
        self.ch_l = int(alpha * channels)
        self.ch_h = channels - self.ch_l

    def __call__(self, x):
        if self.ch_l == 0 or self.ch_h == 0:
            # Degenerate octave split: single-tensor path.
            if isinstance(x, (tuple, list)):
                # Defensive: caller passed a pair even though one branch is empty.
                return tuple(_oct_relu_single(t) for t in x)
            return _oct_relu_single(x)
        xh, xl = x
        return _oct_relu_pair(xh, xl)
        # TODO(synk): PyTorch's inplace=True aliasing has no functional JAX
        # equivalent; semantics (returned values) are identical.


if __name__ == "__main__":
    key = jax.random.PRNGKey(0)
    kh, kl = jax.random.split(key)

    # channels=4, alpha=0.5 -> ch_h=2, ch_l=2 : tuple input path.
    # Octave convention: low-frequency branch has half spatial resolution.
    xh = jax.random.normal(kh, (2, 2, 16, 16), dtype=jnp.float32)   # NCHW
    xl = jax.random.normal(kl, (2, 2, 8, 8), dtype=jnp.float32)     # NCHW

    mod = ReLUOctConv2d(channels=4, alpha=0.5)
    yh, yl = mod((xh, xl))
    yh, yl = jax.block_until_ready(yh), jax.block_until_ready(yl)

    # Correctness check against plain-JAX reference.
    assert yh.shape == xh.shape and yh.dtype == xh.dtype
    assert yl.shape == xl.shape and yl.dtype == xl.dtype
    assert jnp.allclose(yh, jnp.maximum(xh, 0.0))
    assert jnp.allclose(yl, jnp.maximum(xl, 0.0))

    # Degenerate path (alpha=0 -> ch_l==0): single tensor, plain ReLU.
    mod_single = ReLUOctConv2d(channels=4, alpha=0.0)
    y_single = jax.block_until_ready(mod_single(xh))
    assert jnp.allclose(y_single, jnp.maximum(xh, 0.0))

    # bf16 path exercises the dtype-aware sublane multiple (16).
    yh16, yl16 = mod((xh.astype(jnp.bfloat16), xl.astype(jnp.bfloat16)))
    jax.block_until_ready((yh16, yl16))
    assert yh16.dtype == jnp.bfloat16 and yl16.dtype == jnp.bfloat16
    assert jnp.allclose(yh16.astype(jnp.float32),
                        jnp.maximum(xh.astype(jnp.bfloat16), 0).astype(jnp.float32))

    print("KERNEL_OK")
</pallas_src>

<mosaic_0001>
module attributes {stable_mosaic.version = 11 : i64} {
  func.func @_fused_relu_kernel(%arg0: i32, %arg1: memref<8x128xf32, #tpu.memory_space<vmem>>, %arg2: memref<2x128xf32, #tpu.memory_space<vmem>>, %arg3: memref<8x128xf32, #tpu.memory_space<vmem>>, %arg4: memref<2x128xf32, #tpu.memory_space<vmem>>) attributes {dimension_semantics = [#tpu.dimension_semantics<parallel>], iteration_bounds = array<i64: 1>, scalar_prefetch = 0 : i64, scratch_operands = 0 : i64, tpu.core_type = #tpu.core_type<tc>, window_params = [{transform_indices = @transform_0, window_bounds = array<i64: 8, 128>}, {transform_indices = @transform_1, window_bounds = array<i64: 2, 128>}, {transform_indices = @transform_2, window_bounds = array<i64: 8, 128>}, {transform_indices = @transform_3, window_bounds = array<i64: 2, 128>}]} {
    %c0 = arith.constant 0 : index
    %c0_0 = arith.constant 0 : index
    %0 = vector.load %arg1[%c0, %c0_0] : memref<8x128xf32, #tpu.memory_space<vmem>>, vector<8x128xf32>
    %cst = arith.constant 0.000000e+00 : f32
    %1 = vector.broadcast %cst : f32 to vector<8x128xf32>
    %2 = arith.maximumf %0, %1 : vector<8x128xf32>
    %c0_1 = arith.constant 0 : index
    %c0_2 = arith.constant 0 : index
    %3 = vector.load %arg3[%c0_1, %c0_2] : memref<8x128xf32, #tpu.memory_space<vmem>>, vector<8x128xf32>
    tpu.vector_store %arg3[%c0_1, %c0_2], %2 {strides = array<i32>} : memref<8x128xf32, #tpu.memory_space<vmem>>, vector<8x128xf32>,
    %c0_3 = arith.constant 0 : index
    %c0_4 = arith.constant 0 : index
    %4 = vector.load %arg2[%c0_3, %c0_4] : memref<2x128xf32, #tpu.memory_space<vmem>>, vector<2x128xf32>
    %cst_5 = arith.constant 0.000000e+00 : f32
    %5 = vector.broadcast %cst_5 : f32 to vector<2x128xf32>
    %6 = arith.maximumf %4, %5 : vector<2x128xf32>
    %c0_6 = arith.constant 0 : index
    %c0_7 = arith.constant 0 : index
    %7 = vector.load %arg4[%c0_6, %c0_7] : memref<2x128xf32, #tpu.memory_space<vmem>>, vector<2x128xf32>
    tpu.vector_store %arg4[%c0_6, %c0_7], %6 {strides = array<i32>} : memref<2x128xf32, #tpu.memory_space<vmem>>, vector<2x128xf32>,
    return
  }
  func.func @transform_0(%arg0: i32) -> (i32, i32) {
    %c0_i32 = arith.constant 0 : i32
    %0 = arith.minsi %arg0, %c0_i32 : i32
    %c0_i32_0 = arith.constant 0 : i32
    %c0_i32_1 = arith.constant 0 : i32
    return %0, %c0_i32_0 : i32, i32
  }
  func.func @transform_1(%arg0: i32) -> (i32, i32) {
    %c0_i32 = arith.constant 0 : i32
    %0 = arith.minsi %arg0, %c0_i32 : i32
    %c0_i32_0 = arith.constant 0 : i32
    %c0_i32_1 = arith.constant 0 : i32
    return %0, %c0_i32_0 : i32, i32
  }
  func.func @transform_2(%arg0: i32) -> (i32, i32) {
    %c0_i32 = arith.constant 0 : i32
    %0 = arith.minsi %arg0, %c0_i32 : i32
    %c0_i32_0 = arith.constant 0 : i32
    %c0_i32_1 = arith.constant 0 : i32
    return %0, %c0_i32_0 : i32, i32
  }
  func.func @transform_3(%arg0: i32) -> (i32, i32) {
    %c0_i32 = arith.constant 0 : i32
    %0 = arith.minsi %arg0, %c0_i32 : i32
    %c0_i32_0 = arith.constant 0 : i32
    %c0_i32_1 = arith.constant 0 : i32
    return %0, %c0_i32_0 : i32, i32
  }
}

</mosaic_0001>

<llo_original>
// kernel: _oct_relu_pair.1
$region0: #{_oct_relu_pair.1}
  #allocation0 [shape = 'u32[]', space=smem, size = 0x4, offset = 0x4, fixed_abs, tag = 'smem constant byte address 0x4 - core index']
  #allocation1 [shape = 'u32[144,128]{1,0:T(1,128)}', space=vmem, size = 0x12000, scoped, tag = 'internal scratch']
  %s0 = inlined_call_operand.vmem [shape: f32[8,128], index: 0, kind: input, shape index: {}]
  %s1 = inlined_call_operand.vmem [shape: f32[2,128], index: 1, kind: input, shape index: {}]
  %s2 = inlined_call_operand.vmem [shape: f32[8,128], index: 2, kind: output, shape index: {0}]
  %s3 = inlined_call_operand.vmem [shape: f32[2,128], index: 3, kind: output, shape index: {1}]
  %4 = xla_tuple %s2, %s3
  %s5 = sld [smem:[#allocation0]]
  $region26: #{_oct_relu_pair.1} parent=0
    _
  %s7 = ssub.s32 1, %s5
  %s8 = scalar_select 0, %s7, %s5
  // Predicated region
  $region2: #{_oct_relu_pair.1} parent=0 // pred_check
    _
  $region3: #{_oct_relu_pair.1} parent=0 // pred_check_branch
    %10 = sbr.rel (0) target = $region5
  $region4: #{_oct_relu_pair.1} parent=0 // pred_region
    _
  $region5: #{_oct_relu_pair.1} parent=0 // pred_fallthru
    _
  // Predicated region
  $region6: #{_oct_relu_pair.1} parent=0 // pred_check
    _
  $region7: #{_oct_relu_pair.1} parent=0 // pred_check_branch
    %12 = sbr.rel (0) target = $region9
  $region8: #{_oct_relu_pair.1} parent=0 // pred_region
    _
  $region9: #{_oct_relu_pair.1} parent=0 // pred_fallthru
    _
  %v13 = vld [vmem:[%s0] sm:$0xff]
  %v14 = vmax.f32 %v13, 0.0
  %15 = vst [vmem:[%s2] sm:$0xff] %v14
  %v16 = vld [vmem:[%s1] sm:$0x3]
  %v17 = vmax.f32 %v16, 0.0
  %18 = vst [vmem:[%s3] sm:$0x3] %v17
  // Predicated region
  $region10: #{_oct_relu_pair.1} parent=0 // pred_check
    _
  $region11: #{_oct_relu_pair.1} parent=0 // pred_check_branch
    %20 = sbr.rel (0) target = $region13
  $region12: #{_oct_relu_pair.1} parent=0 // pred_region
    _
  $region13: #{_oct_relu_pair.1} parent=0 // pred_fallthru
    _
  // Predicated region
  $region14: #{_oct_relu_pair.1} parent=0 // pred_check
    _
  $region15: #{_oct_relu_pair.1} parent=0 // pred_check_branch
    %22 = sbr.rel (0) target = $region17
  $region16: #{_oct_relu_pair.1} parent=0 // pred_region
    _
  $region17: #{_oct_relu_pair.1} parent=0 // pred_fallthru
    _
  // Predicated region
  $region18: #{_oct_relu_pair.1} parent=0 // pred_check
    _
  $region19: #{_oct_relu_pair.1} parent=0 // pred_check_branch
    %24 = sbr.rel (0) target = $region21
  $region20: #{_oct_relu_pair.1} parent=0 // pred_region
    _
  $region21: #{_oct_relu_pair.1} parent=0 // pred_fallthru
    _
  // Predicated region
  $region22: #{_oct_relu_pair.1} parent=0 // pred_check
    _
  $region23: #{_oct_relu_pair.1} parent=0 // pred_check_branch
    %26 = sbr.rel (0) target = $region25
  $region24: #{_oct_relu_pair.1} parent=0 // pred_region
    _
  $region25: #{_oct_relu_pair.1} parent=0 // pred_fallthru
    _

</llo_original>
